<compile_context>
chip_gen: v5e
topology: v5e:2x2
jax: 0.10.0
libtpu: 0.0.40
codegen_flags: <defaults>
</compile_context>

<pallas_src>
import functools

import jax
import jax.numpy as jnp
from jax.experimental import pallas as pl
from jax.experimental.pallas import tpu as pltpu


def _round_up(a, b):
    return ((a + b - 1) // b) * b


def _cdiv(a, b):
    return (a + b - 1) // b


def _conv_stats_kernel(x_ref, xh_ref, w_ref, m_ref, y_ref, ps_ref, *, shifts, tile):
    """Pass 1: ReLU -> fused (depthwise x pointwise) dilated conv -> per-tile BN stats.

    x_ref : (C_in_p, TILE)             main activation tile (flat padded spatial on lanes)
    xh_ref: (C_in_p, HALO)             right halo (leading lanes of the next tile)
    w_ref : (C_out_p, KH*KW*C_in_p)    tap-stacked fused weights (grid-resident)
    m_ref : (1, L_pad)                 valid-output mask, grid-resident (fetched once)
    y_ref : (C_out_p, TILE)            pre-BN conv output
    ps_ref: (1, C_out_p, 2)            per-tile [sum, sum_of_squares] per channel
    """
    # ReLU once on un-replicated data (zero padding is ReLU-invariant).
    xcat = jnp.maximum(jnp.concatenate([x_ref[...], xh_ref[...]], axis=1), 0.0)

    # Stack the KH*KW statically shifted lane-windows along sublanes and do the whole
    # conv as ONE MXU matmul with contraction K = KH*KW*C_in_p.
    xstk = jnp.concatenate([xcat[:, s:s + tile] for s in shifts], axis=0)
    acc = jnp.dot(w_ref[...], xstk, preferred_element_type=jnp.float32)
    y_ref[...] = acc

    # Per-channel partial BatchNorm statistics over the valid lanes of this tile.
    # The mask is resident in VMEM; slice the lanes belonging to this tile.
    start = pl.multiple_of(pl.program_id(0) * tile, 128)
    mask = m_ref[:, pl.ds(start, tile)]          # (1, TILE), broadcast over channels
    yv = acc * mask
    ps_ref[0, :, 0:1] = jnp.sum(yv, axis=1, keepdims=True)
    ps_ref[0, :, 1:2] = jnp.sum(yv * acc, axis=1, keepdims=True)


def _bn_apply_kernel(y_ref, scale_ref, shift_ref, o_ref):
    """Pass 2: lane-dense BatchNorm apply: o = y * scale + shift."""
    o_ref[...] = (y_ref[...] * scale_ref[...] + shift_ref[...]).astype(o_ref.dtype)


def dil_conv_forward(x, w_dw, w_pw, gamma, beta, *, stride=1, padding=0,
                     dilation=1, eps=1e-5, tile_m=2048):
    """DilConv forward.

    x: (N, C_in, H, W) f32 NCHW; w_dw: (C_in, 1, KH, KW); w_pw: (C_out, C_in, 1, 1);
    gamma/beta: (C_out,) BatchNorm affine params.  Returns (N, C_out, Ho, Wo) with
    training-mode (batch-statistics) BatchNorm.
    """
    n, c_in, h, w = x.shape
    c_out = int(w_pw.shape[0])
    kh, kw = int(w_dw.shape[2]), int(w_dw.shape[3])
    str_h = str_w = int(stride)
    dil_h = dil_w = int(dilation)
    pad_h = pad_w = int(padding)

    hp, wp = h + 2 * pad_h, w + 2 * pad_w
    ho = (hp - dil_h * (kh - 1) - 1) // str_h + 1
    wo = (wp - dil_w * (kw - 1) - 1) // str_w + 1

    c_in_p = _round_up(c_in, 8)
    c_out_p = _round_up(c_out, 8)
    ntaps = kh * kw
    kdim = ntaps * c_in_p

    # Depthwise (groups=C_in) followed by bias-free 1x1 pointwise == one dense conv.
    # Flatten to the tap-stacked MXU layout (C_out_p, ntaps*C_in_p): column
    # t*C_in_p + c multiplies the activation slice shifted by shifts[t].
    w_eff = (w_pw[:, :, 0, 0][:, :, None, None] *
             w_dw[:, 0, :, :][None, :, :, :]).astype(jnp.float32)      # (Co, Ci, KH, KW)
    w_taps = jnp.transpose(w_eff, (2, 3, 0, 1)).reshape(ntaps, c_out, c_in)
    w_taps = jnp.pad(w_taps, ((0, 0), (0, c_out_p - c_out), (0, c_in_p - c_in)))
    w_stk = jnp.transpose(w_taps, (1, 0, 2)).reshape(c_out_p, kdim)

    # Zero-pad spatially (ReLU(0)=0 => pad-then-ReLU == ReLU-then-pad) and flatten:
    # x2d[c, n*Hp*Wp + r*Wp + col] = x_pad[n, c, r, col]
    x_pad = jnp.pad(x.astype(jnp.float32),
                    ((0, 0), (0, c_in_p - c_in), (pad_h, pad_h), (pad_w, pad_w)))
    m_total = n * hp * wp
    x2d = jnp.transpose(x_pad, (1, 0, 2, 3)).reshape(c_in_p, m_total)

    # Static per-tap lane shifts in the flattened padded layout.
    shifts = tuple(i * dil_h * wp + j * dil_w for i in range(kh) for j in range(kw))
    halo = _round_up(max(max(shifts), 1), 128)             # 128-aligned halo block

    # Generation-aware VMEM limit (v7x has 64 MiB per TC; v5e/v6e have 128 MiB).
    try:
        vmem_cap = int(pltpu.get_tpu_info().vmem_capacity_bytes)
    except Exception:
        vmem_cap = 64 * 1024 * 1024
    vmem_limit = min(max(vmem_cap - 16 * 1024 * 1024, 32 * 1024 * 1024),
                     96 * 1024 * 1024)

    # Lane-tile sizing: halo-aligned multiple of 128, capped by (a) the requested
    # tile_m, (b) a VMEM budget including the stacked (ntaps*C_in_p, TILE) operand and
    # double-buffered I/O, and (c) small enough that nt >= 2 so both v7x TCs get work.
    per_lane_bytes = 4 * ((3 + ntaps) * c_in_p + 4 * c_out_p)
    cap_units = max(1, (vmem_limit // 2 // per_lane_bytes) // halo)
    req_units = max(1, _cdiv(tile_m, halo))
    two_units = max(1, _cdiv(_cdiv(m_total, 2), halo))
    tile = halo * max(1, min(req_units, cap_units, two_units))
    units = tile // halo
    nt = _cdiv(m_total, tile)
    l_pad = nt * tile + halo
    x2d = jnp.pad(x2d, ((0, 0), (0, l_pad - m_total)))

    # Valid-output mask over flattened padded coords: in-image, on-stride positions.
    # Constant index_map below => DMA'd once per core, no per-tile HBM mask stream.
    mm = jnp.arange(l_pad, dtype=jnp.int32)
    rem = mm % (hp * wp)
    row = rem // wp
    col = rem % wp
    valid = ((mm < m_total)
             & (row % str_h == 0) & (row < ho * str_h)
             & (col % str_w == 0) & (col < wo * str_w))
    mask2d = valid.astype(jnp.float32)[None, :]

    cparams = pltpu.CompilerParams(
        dimension_semantics=("parallel",),                 # shards across v7x's 2 TCs
        vmem_limit_bytes=int(vmem_limit),
    )
    conv_cost = pl.CostEstimate(
        flops=2 * kdim * c_out_p * nt * tile,
        transcendentals=0,
        bytes_accessed=4 * (c_in_p * l_pad + c_in_p * halo * nt + kdim * c_out_p
                            + l_pad + c_out_p * nt * tile + nt * c_out_p * 2),
    )

    kernel1 = functools.partial(_conv_stats_kernel, shifts=shifts, tile=tile)
    y2d, part = pl.pallas_call(
        kernel1,
        out_shape=(
            jax.ShapeDtypeStruct((c_out_p, nt * tile), jnp.float32),
            jax.ShapeDtypeStruct((nt, c_out_p, 2), jnp.float32),
        ),
        grid=(nt,),
        in_specs=[
            pl.BlockSpec((c_in_p, tile), lambda t: (0, t)),
            pl.BlockSpec((c_in_p, halo), lambda t: (0, (t + 1) * units)),
            pl.BlockSpec((c_out_p, kdim), lambda t: (0, 0)),   # resident weights
            pl.BlockSpec((1, l_pad), lambda t: (0, 0)),        # resident mask
        ],
        out_specs=(
            pl.BlockSpec((c_out_p, tile), lambda t: (0, t)),
            pl.BlockSpec((1, c_out_p, 2), lambda t: (t, 0, 0)),
        ),
        compiler_params=cparams,
        cost_estimate=conv_cost,
    )(x2d, x2d, w_stk, mask2d)

    # Tiny cross-tile BN finalize (C_out scalars): mean, biased var, affine fold.
    # TODO(synk): E[y^2]-mean^2 can cancel when |mean|>>std; a centered second pass
    # would be more robust.  BatchNorm2d running_mean/running_var buffer updates
    # (training-time side effect) are not modeled; only the normalized output is made.
    count = float(n * ho * wo)
    sums = jnp.sum(part, axis=0)                           # (C_out_p, 2)
    mean = sums[:, 0] / count
    var = jnp.maximum(sums[:, 1] / count - mean * mean, 0.0)
    inv_std = jax.lax.rsqrt(var + eps)
    gamma_p = jnp.pad(gamma.astype(jnp.float32), (0, c_out_p - c_out),
                      constant_values=1.0)
    beta_p = jnp.pad(beta.astype(jnp.float32), (0, c_out_p - c_out))
    scale = (gamma_p * inv_std)[:, None]                   # (C_out_p, 1)
    shift = (beta_p - mean * gamma_p * inv_std)[:, None]   # (C_out_p, 1)

    bn_cost = pl.CostEstimate(
        flops=2 * c_out_p * nt * tile,
        transcendentals=0,
        bytes_accessed=4 * (2 * c_out_p * nt * tile + 4 * c_out_p),
    )
    out2d = pl.pallas_call(
        _bn_apply_kernel,
        out_shape=jax.ShapeDtypeStruct((c_out_p, nt * tile), x.dtype),
        grid=(nt,),
        in_specs=[
            pl.BlockSpec((c_out_p, tile), lambda t: (0, t)),
            pl.BlockSpec((c_out_p, 1), lambda t: (0, 0)),
            pl.BlockSpec((c_out_p, 1), lambda t: (0, 0)),
        ],
        out_specs=pl.BlockSpec((c_out_p, tile), lambda t: (0, t)),
        compiler_params=cparams,
        cost_estimate=bn_cost,
    )(y2d, scale, shift)

    # Un-flatten (glue): drop channel/lane padding, keep in-image on-stride positions.
    # TODO(synk): at stride>1 this decimation discards ~3/4 of y2d; folding the stride/
    # compaction into pass 2 (strided index_maps, compact lane-dense output) would cut
    # the intermediate HBM traffic further.
    out4 = out2d[:c_out, :m_total].reshape(c_out, n, hp, wp)
    out4 = out4[:, :, ::str_h, ::str_w][:, :, :ho, :wo]
    return jnp.transpose(out4, (1, 0, 2, 3))


def dil_conv_ref(x, w_dw, w_pw, gamma, beta, *, stride, padding, dilation, eps=1e-5):
    """Pure-JAX reference matching the PyTorch DilConv forward (training-mode BN)."""
    xr = jnp.maximum(x, 0.0)
    y = jax.lax.conv_general_dilated(
        xr, w_dw, window_strides=(stride, stride),
        padding=((padding, padding), (padding, padding)),
        rhs_dilation=(dilation, dilation),
        dimension_numbers=("NCHW", "OIHW", "NCHW"),
        feature_group_count=x.shape[1],
        precision=jax.lax.Precision.HIGHEST)
    y = jax.lax.conv_general_dilated(
        y, w_pw, window_strides=(1, 1), padding="VALID",
        dimension_numbers=("NCHW", "OIHW", "NCHW"),
        precision=jax.lax.Precision.HIGHEST)
    mean = y.mean(axis=(0, 2, 3), keepdims=True)
    var = ((y - mean) ** 2).mean(axis=(0, 2, 3), keepdims=True)
    yhat = (y - mean) * jax.lax.rsqrt(var + eps)
    return yhat * gamma[None, :, None, None] + beta[None, :, None, None]


if __name__ == "__main__":
    key = jax.random.PRNGKey(0)
    kx, k1, k2, k3, k4 = jax.random.split(key, 5)

    N, C_IN, C_OUT, H, W = 2, 4, 8, 16, 16
    x = jax.random.normal(kx, (N, C_IN, H, W), dtype=jnp.float32)
    gamma = jnp.ones((C_OUT,), jnp.float32)   # BatchNorm2d(affine=True) init
    beta = jnp.zeros((C_OUT,), jnp.float32)

    # (kernel_size, stride, padding, dilation): the standard DilConv configurations.
    configs = [
        (3, 1, 2, 2, k1, k2),   # dil_conv_3x3 (normal cell)
        (5, 2, 4, 2, k3, k4),   # dil_conv_5x5 (reduction cell, stride 2)
    ]
    for ks, st, pd, dl, kwd, kwp in configs:
        w_dw = 0.3 * jax.random.normal(kwd, (C_IN, 1, ks, ks), dtype=jnp.float32)
        w_pw = 0.3 * jax.random.normal(kwp, (C_OUT, C_IN, 1, 1), dtype=jnp.float32)

        fwd = jax.jit(functools.partial(dil_conv_forward, stride=st, padding=pd,
                                        dilation=dl))
        out = jax.block_until_ready(fwd(x, w_dw, w_pw, gamma, beta))
        ref = dil_conv_ref(x, w_dw, w_pw, gamma, beta, stride=st, padding=pd,
                           dilation=dl)

        ho = (H + 2 * pd - dl * (ks - 1) - 1) // st + 1
        wo = (W + 2 * pd - dl * (ks - 1) - 1) // st + 1
        assert out.shape == (N, C_OUT, ho, wo), out.shape
        err = float(jnp.max(jnp.abs(out - ref)))
        assert jnp.allclose(out, ref, rtol=1e-3, atol=1e-3), err

    print("KERNEL_OK")
</pallas_src>

<mosaic_0001>
module attributes {stable_mosaic.version = 11 : i64} {
  func.func @_conv_stats_kernel(%arg0: i32, %arg1: memref<8x512xf32, #tpu.memory_space<vmem>>, %arg2: memref<8x128xf32, #tpu.memory_space<vmem>>, %arg3: memref<8x72xf32, #tpu.memory_space<vmem>>, %arg4: memref<1x1152xf32, #tpu.memory_space<vmem>>, %arg5: memref<8x512xf32, #tpu.memory_space<vmem>>, %arg6: memref<1x8x2xf32, #tpu.memory_space<vmem>>) attributes {dimension_semantics = [#tpu.dimension_semantics<parallel>], iteration_bounds = array<i64: 2>, scalar_prefetch = 0 : i64, scratch_operands = 0 : i64, tpu.core_type = #tpu.core_type<tc>, window_params = [{transform_indices = @transform_0, window_bounds = array<i64: 8, 512>}, {transform_indices = @transform_1, window_bounds = array<i64: 8, 128>}, {pipeline_mode = #tpu.pipeline_mode<synchronous>, transform_indices = @transform_2, window_bounds = array<i64: 8, 72>}, {pipeline_mode = #tpu.pipeline_mode<synchronous>, transform_indices = @transform_3, window_bounds = array<i64: 1, 1152>}, {transform_indices = @transform_4, window_bounds = array<i64: 8, 512>}, {transform_indices = @transform_5, window_bounds = array<i64: 1, 8, 2>}]} {
    %c0 = arith.constant 0 : index
    %c0_0 = arith.constant 0 : index
    %0 = vector.load %arg1[%c0, %c0_0] : memref<8x512xf32, #tpu.memory_space<vmem>>, vector<8x512xf32>
    %c0_1 = arith.constant 0 : index
    %c0_2 = arith.constant 0 : index
    %1 = vector.load %arg2[%c0_1, %c0_2] : memref<8x128xf32, #tpu.memory_space<vmem>>, vector<8x128xf32>
    %2 = tpu.concatenate %0, %1 in 1 : vector<8x512xf32>, vector<8x128xf32> -> vector<8x640xf32>
    %cst = arith.constant 0.000000e+00 : f32
    %3 = vector.broadcast %cst : f32 to vector<8x640xf32>
    %4 = arith.maximumf %2, %3 : vector<8x640xf32>
    %5 = vector.extract_strided_slice %4 {offsets = [0, 0], sizes = [8, 512], strides = [1, 1]} : vector<8x640xf32> to vector<8x512xf32>
    %6 = vector.extract_strided_slice %4 {offsets = [0, 2], sizes = [8, 512], strides = [1, 1]} : vector<8x640xf32> to vector<8x512xf32>
    %7 = vector.extract_strided_slice %4 {offsets = [0, 4], sizes = [8, 512], strides = [1, 1]} : vector<8x640xf32> to vector<8x512xf32>
    %8 = vector.extract_strided_slice %4 {offsets = [0, 40], sizes = [8, 512], strides = [1, 1]} : vector<8x640xf32> to vector<8x512xf32>
    %9 = vector.extract_strided_slice %4 {offsets = [0, 42], sizes = [8, 512], strides = [1, 1]} : vector<8x640xf32> to vector<8x512xf32>
    %10 = vector.extract_strided_slice %4 {offsets = [0, 44], sizes = [8, 512], strides = [1, 1]} : vector<8x640xf32> to vector<8x512xf32>
    %11 = vector.extract_strided_slice %4 {offsets = [0, 80], sizes = [8, 512], strides = [1, 1]} : vector<8x640xf32> to vector<8x512xf32>
    %12 = vector.extract_strided_slice %4 {offsets = [0, 82], sizes = [8, 512], strides = [1, 1]} : vector<8x640xf32> to vector<8x512xf32>
    %13 = vector.extract_strided_slice %4 {offsets = [0, 84], sizes = [8, 512], strides = [1, 1]} : vector<8x640xf32> to vector<8x512xf32>
    %14 = tpu.concatenate %5, %6, %7, %8, %9, %10, %11, %12, %13 in 0 : vector<8x512xf32>, vector<8x512xf32>, vector<8x512xf32>, vector<8x512xf32>, vector<8x512xf32>, vector<8x512xf32>, vector<8x512xf32>, vector<8x512xf32>, vector<8x512xf32> -> vector<72x512xf32>
    %c0_3 = arith.constant 0 : index
    %c0_4 = arith.constant 0 : index
    %15 = vector.load %arg3[%c0_3, %c0_4] : memref<8x72xf32, #tpu.memory_space<vmem>>, vector<8x72xf32>
    %cst_5 = arith.constant dense<0.000000e+00> : vector<8x512xf32>
    %16 = tpu.matmul %15, %14, %cst_5 {dimension_numbers = #tpu.dot_dimension_numbers<[1], [0], [0], [1], [0, 0, 1, 1], [], []>} : vector<8x72xf32>, vector<72x512xf32>, vector<8x512xf32> -> vector<8x512xf32>
    %c0_6 = arith.constant 0 : index
    %c0_7 = arith.constant 0 : index
    %17 = vector.load %arg5[%c0_6, %c0_7] : memref<8x512xf32, #tpu.memory_space<vmem>>, vector<8x512xf32>
    tpu.vector_store %arg5[%c0_6, %c0_7], %16 {strides = array<i32>} : memref<8x512xf32, #tpu.memory_space<vmem>>, vector<8x512xf32>,
    %c512_i32 = arith.constant 512 : i32
    %18 = arith.muli %arg0, %c512_i32 : i32
    %19 = tpu.assume_multiple %18, 128 : i32
    %c0_8 = arith.constant 0 : index
    %20 = arith.index_cast %19 : i32 to index
    %21 = vector.load %arg4[%c0_8, %20] : memref<1x1152xf32, #tpu.memory_space<vmem>>, vector<1x512xf32>
    %22 = vector.broadcast %21 : vector<1x512xf32> to vector<8x512xf32>
    %23 = arith.mulf %16, %22 : vector<8x512xf32>
    %cst_9 = arith.constant dense<0.000000e+00> : vector<8xf32>
    %24 = vector.multi_reduction <add>, %23, %cst_9 [1] : vector<8x512xf32> to vector<8xf32>
    %25 = vector.shape_cast %24 : vector<8xf32> to vector<8x1xf32>
    %c0_10 = arith.constant 0 : index
    %c0_11 = arith.constant 0 : index
    %c0_12 = arith.constant 0 : index
    %26 = vector.load %arg6[%c0_10, %c0_11, %c0_12] : memref<1x8x2xf32, #tpu.memory_space<vmem>>, vector<1x8x1xf32>
    %27 = vector.shape_cast %26 : vector<1x8x1xf32> to vector<8x1xf32>
    %28 = vector.shape_cast %25 : vector<8x1xf32> to vector<1x8x1xf32>
    tpu.vector_store %arg6[%c0_10, %c0_11, %c0_12], %28 {strides = array<i32>} : memref<1x8x2xf32, #tpu.memory_space<vmem>>, vector<1x8x1xf32>,
    %29 = arith.mulf %23, %16 : vector<8x512xf32>
    %cst_13 = arith.constant dense<0.000000e+00> : vector<8xf32>
    %30 = vector.multi_reduction <add>, %29, %cst_13 [1] : vector<8x512xf32> to vector<8xf32>
    %31 = vector.shape_cast %30 : vector<8xf32> to vector<8x1xf32>
    %c0_14 = arith.constant 0 : index
    %c0_15 = arith.constant 0 : index
    %c1 = arith.constant 1 : index
    %32 = vector.load %arg6[%c0_14, %c0_15, %c1] : memref<1x8x2xf32, #tpu.memory_space<vmem>>, vector<1x8x1xf32>
    %33 = vector.shape_cast %32 : vector<1x8x1xf32> to vector<8x1xf32>
    %34 = vector.shape_cast %31 : vector<8x1xf32> to vector<1x8x1xf32>
    tpu.vector_store %arg6[%c0_14, %c0_15, %c1], %34 {strides = array<i32>} : memref<1x8x2xf32, #tpu.memory_space<vmem>>, vector<1x8x1xf32>,
    return
  }
  func.func @transform_0(%arg0: i32) -> (i32, i32) {
    %c0_i32 = arith.constant 0 : i32
    %c0_i32_0 = arith.constant 0 : i32
    return %c0_i32, %arg0 : i32, i32
  }
  func.func @transform_1(%arg0: i32) -> (i32, i32) {
    %c1_i32 = arith.constant 1 : i32
    %0 = arith.addi %arg0, %c1_i32 : i32
    %c4_i32 = arith.constant 4 : i32
    %1 = arith.muli %0, %c4_i32 : i32
    %c0_i32 = arith.constant 0 : i32
    %c0_i32_0 = arith.constant 0 : i32
    return %c0_i32, %1 : i32, i32
  }
  func.func @transform_2(%arg0: i32) -> (i32, i32) {
    %c0_i32 = arith.constant 0 : i32
    %c0_i32_0 = arith.constant 0 : i32
    %c0_i32_1 = arith.constant 0 : i32
    return %c0_i32, %c0_i32_0 : i32, i32
  }
  func.func @transform_3(%arg0: i32) -> (i32, i32) {
    %c0_i32 = arith.constant 0 : i32
    %c0_i32_0 = arith.constant 0 : i32
    %c0_i32_1 = arith.constant 0 : i32
    return %c0_i32, %c0_i32_0 : i32, i32
  }
  func.func @transform_4(%arg0: i32) -> (i32, i32) {
    %c0_i32 = arith.constant 0 : i32
    %c0_i32_0 = arith.constant 0 : i32
    return %c0_i32, %arg0 : i32, i32
  }
  func.func @transform_5(%arg0: i32) -> (i32, i32, i32) {
    %c0_i32 = arith.constant 0 : i32
    %c0_i32_0 = arith.constant 0 : i32
    %c0_i32_1 = arith.constant 0 : i32
    return %arg0, %c0_i32, %c0_i32_0 : i32, i32, i32
  }
}

module attributes {stable_mosaic.version = 11 : i64} {
  func.func @_bn_apply_kernel(%arg0: i32, %arg1: memref<8x512xf32, #tpu.memory_space<vmem>>, %arg2: memref<8x1xf32, #tpu.memory_space<vmem>>, %arg3: memref<8x1xf32, #tpu.memory_space<vmem>>, %arg4: memref<8x512xf32, #tpu.memory_space<vmem>>) attributes {dimension_semantics = [#tpu.dimension_semantics<parallel>], iteration_bounds = array<i64: 2>, scalar_prefetch = 0 : i64, scratch_operands = 0 : i64, tpu.core_type = #tpu.core_type<tc>, window_params = [{transform_indices = @transform_0, window_bounds = array<i64: 8, 512>}, {pipeline_mode = #tpu.pipeline_mode<synchronous>, transform_indices = @transform_1, window_bounds = array<i64: 8, 1>}, {pipeline_mode = #tpu.pipeline_mode<synchronous>, transform_indices = @transform_2, window_bounds = array<i64: 8, 1>}, {transform_indices = @transform_3, window_bounds = array<i64: 8, 512>}]} {
    %c0 = arith.constant 0 : index
    %c0_0 = arith.constant 0 : index
    %0 = vector.load %arg1[%c0, %c0_0] : memref<8x512xf32, #tpu.memory_space<vmem>>, vector<8x512xf32>
    %c0_1 = arith.constant 0 : index
    %c0_2 = arith.constant 0 : index
    %1 = vector.load %arg2[%c0_1, %c0_2] : memref<8x1xf32, #tpu.memory_space<vmem>>, vector<8x1xf32>
    %2 = vector.broadcast %1 : vector<8x1xf32> to vector<8x512xf32>
    %3 = arith.mulf %0, %2 : vector<8x512xf32>
    %c0_3 = arith.constant 0 : index
    %c0_4 = arith.constant 0 : index
    %4 = vector.load %arg3[%c0_3, %c0_4] : memref<8x1xf32, #tpu.memory_space<vmem>>, vector<8x1xf32>
    %5 = vector.broadcast %4 : vector<8x1xf32> to vector<8x512xf32>
    %6 = arith.addf %3, %5 : vector<8x512xf32>
    %c0_5 = arith.constant 0 : index
    %c0_6 = arith.constant 0 : index
    %7 = vector.load %arg4[%c0_5, %c0_6] : memref<8x512xf32, #tpu.memory_space<vmem>>, vector<8x512xf32>
    tpu.vector_store %arg4[%c0_5, %c0_6], %6 {strides = array<i32>} : memref<8x512xf32, #tpu.memory_space<vmem>>, vector<8x512xf32>,
    return
  }
  func.func @transform_0(%arg0: i32) -> (i32, i32) {
    %c0_i32 = arith.constant 0 : i32
    %c0_i32_0 = arith.constant 0 : i32
    return %c0_i32, %arg0 : i32, i32
  }
  func.func @transform_1(%arg0: i32) -> (i32, i32) {
    %c0_i32 = arith.constant 0 : i32
    %c0_i32_0 = arith.constant 0 : i32
    %c0_i32_1 = arith.constant 0 : i32
    return %c0_i32, %c0_i32_0 : i32, i32
  }
  func.func @transform_2(%arg0: i32) -> (i32, i32) {
    %c0_i32 = arith.constant 0 : i32
    %c0_i32_0 = arith.constant 0 : i32
    %c0_i32_1 = arith.constant 0 : i32
    return %c0_i32, %c0_i32_0 : i32, i32
  }
  func.func @transform_3(%arg0: i32) -> (i32, i32) {
    %c0_i32 = arith.constant 0 : i32
    %c0_i32_0 = arith.constant 0 : i32
    return %c0_i32, %arg0 : i32, i32
  }
}

</mosaic_0001>

<llo_original>
// kernel: dil_conv_forward.3
$region0: #{dil_conv_forward.3}
  #allocation0 [shape = 'u32[]', space=smem, size = 0x4, offset = 0x4, fixed_abs, tag = 'smem constant byte address 0x4 - core index']
  #allocation1 [shape = 'u32[72,128]{1,0:T(1,128)}', space=vmem, size = 0x9000, scoped, tag = 'internal scratch']
  %s0 = inlined_call_operand.vmem [shape: f32[8,1024], index: 0, kind: input, shape index: {}]
  %s1 = inlined_call_operand.vmem [shape: f32[8,1], index: 1, kind: input, shape index: {}]
  %s2 = inlined_call_operand.vmem [shape: f32[8,1], index: 2, kind: input, shape index: {}]
  %s3 = inlined_call_operand.vmem [shape: f32[8,1024], index: 3, kind: output, shape index: {}]
  %s4 = sld [smem:[#allocation0]]
  $region45: #{dil_conv_forward.3} parent=0
    _
  %s6 = ssub.s32 1, %s4
  %s7 = scalar_select 0, %s6, %s4
  loop: start=0, step=1, limit=4
  $region2: #{dil_conv_forward.3} parent=0 // loop_pre_header
    _
  $region3: #{dil_conv_forward.3} parent=0 // loop_header
    %s9 = sphi 0, %s13
    %p10 = scmp.ge.s32.totalorder %s9, 4
    %s19 = sphi 0, %s21
    %s22 = sphi 0, %s19
    %s23 = sphi 0, %s22
    %s39 = sphi 0, %s23
    %s43 = sphi 0, %s43
    %s45 = sphi 0, %s43
    %s46 = sphi 0, %s45
    %s60 = sphi 0, %s46
    %s64 = sphi 0, %s64
    %s66 = sphi 0, %s64
    %s67 = sphi 0, %s66
    %s81 = sphi 0, %s67
    %s87 = sphi 0, %s89
    %s90 = sphi 0, %s87
    %s91 = sphi 0, %s90
    %s107 = sphi 0, %s91
  $region4: #{dil_conv_forward.3} parent=0 // loop_header_branch
    %12 = sbr.rel (%p10) target = $region8
  $region5: #{dil_conv_forward.3} parent=0 // loop_body
    %s14 = ssub.s32 %s9, 1
    %s15 = ssub.s32 %s9, 2
    %s16 = sadd.s32 %s9, 1
    %s17 = ssub.s32 %s9, %s16
    %p18 = scmp.eq.s32.totalorder %s17, 0
    %s20 = sadd.s32 %s19, 1
    %s21 = scalar_select %p18, %s19, %s20
    %p24 = pneg %p18
    %p25 = scmp.eq.s32.totalorder %s9, 1
    %p26 = por %p24, %p25
    %p27 = scmp.ne.s32.totalorder %s19, %s22
    %p28 = scmp.eq.s32.totalorder %s9, 0
    %p29 = por %p27, %p28
    %p30 = scmp.ne.s32.totalorder %s19, %s22
    %p31 = scmp.eq.s32.totalorder %s14, 1
    %p32 = por %p30, %p31
    %p33 = scmp.ne.s32.totalorder %s22, %s23
    %p34 = scmp.eq.s32.totalorder %s14, 0
    %p35 = por %p33, %p34
    %p36 = scmp.ne.s32.totalorder %s22, %s23
    %p37 = scmp.eq.s32.totalorder %s15, 1
    %p38 = por %p36, %p37
    %p40 = scmp.ne.s32.totalorder %s23, %s39
    %p41 = scmp.eq.s32.totalorder %s15, 0
    %p42 = por %p40, %p41
    %s44 = sadd.s32 %s43, 1
    %p47 = scmp.eq.s32.totalorder %s9, 1
    %p48 = scmp.ne.s32.totalorder %s43, %s45
    %p49 = scmp.eq.s32.totalorder %s9, 0
    %p50 = por %p48, %p49
    %p51 = scmp.ne.s32.totalorder %s43, %s45
    %p52 = scmp.eq.s32.totalorder %s14, 1
    %p53 = por %p51, %p52
    %p54 = scmp.ne.s32.totalorder %s45, %s46
    %p55 = scmp.eq.s32.totalorder %s14, 0
    %p56 = por %p54, %p55
    %p57 = scmp.ne.s32.totalorder %s45, %s46
    %p58 = scmp.eq.s32.totalorder %s15, 1
    %p59 = por %p57, %p58
    %p61 = scmp.ne.s32.totalorder %s46, %s60
    %p62 = scmp.eq.s32.totalorder %s15, 0
    %p63 = por %p61, %p62
    %s65 = sadd.s32 %s64, 1
    %p68 = scmp.eq.s32.totalorder %s9, 1
    %p69 = scmp.ne.s32.totalorder %s64, %s66
    %p70 = scmp.eq.s32.totalorder %s9, 0
    %p71 = por %p69, %p70
    %p72 = scmp.ne.s32.totalorder %s64, %s66
    %p73 = scmp.eq.s32.totalorder %s14, 1
    %p74 = por %p72, %p73
    %p75 = scmp.ne.s32.totalorder %s66, %s67
    %p76 = scmp.eq.s32.totalorder %s14, 0
    %p77 = por %p75, %p76
    %p78 = scmp.ne.s32.totalorder %s66, %s67
    %p79 = scmp.eq.s32.totalorder %s15, 1
    %p80 = por %p78, %p79
    %p82 = scmp.ne.s32.totalorder %s67, %s81
    %p83 = scmp.eq.s32.totalorder %s15, 0
    %p84 = por %p82, %p83
    %s85 = ssub.s32 %s9, %s16
    %p86 = scmp.eq.s32.totalorder %s85, 0
    %s88 = sadd.s32 %s87, 1
    %s89 = scalar_select %p86, %s87, %s88
    %p92 = pneg %p86
    %p93 = scmp.eq.s32.totalorder %s9, 1
    %p94 = por %p92, %p93
    %p95 = scmp.ne.s32.totalorder %s87, %s90
    %p96 = scmp.eq.s32.totalorder %s9, 0
    %p97 = por %p95, %p96
    %p98 = scmp.ne.s32.totalorder %s87, %s90
    %p99 = scmp.eq.s32.totalorder %s14, 1
    %p100 = por %p98, %p99
    %p101 = scmp.ne.s32.totalorder %s90, %s91
    %p102 = scmp.eq.s32.totalorder %s14, 0
    %p103 = por %p101, %p102
    %p104 = scmp.ne.s32.totalorder %s90, %s91
    %p105 = scmp.eq.s32.totalorder %s15, 1
    %p106 = por %p104, %p105
    %p108 = scmp.ne.s32.totalorder %s91, %s107
    %p109 = scmp.eq.s32.totalorder %s15, 0
    %p110 = por %p108, %p109
    %p111 = scmp.le.s32.totalorder 1, %s9
    %p112 = scmp.lt.s32.totalorder %s9, 3
    %p113 = pnand %p111, %p112
    %p114 = pneg %p113
    // Predicated region
    $region9: #{dil_conv_forward.3} parent=5 // pred_check
      _
    $region10: #{dil_conv_forward.3} parent=5 // pred_check_branch
      %116 = sbr.rel (%p113) target = $region12
    $region11: #{dil_conv_forward.3} parent=5 // pred_region
      %s117 = ssub.s32 %s9, 1
      // Predicated region
      $region13: #{dil_conv_forward.3} parent=11 // pred_check
        %p118 = pneg %p56
      $region14: #{dil_conv_forward.3} parent=11 // pred_check_branch
        %120 = sbr.rel (%p118) target = $region16
      $region15: #{dil_conv_forward.3} parent=11 // pred_region
        _
      $region16: #{dil_conv_forward.3} parent=11 // pred_fallthru
        _
      // Predicated region
      $region17: #{dil_conv_forward.3} parent=11 // pred_check
        %p121 = pneg %p77
      $region18: #{dil_conv_forward.3} parent=11 // pred_check_branch
        %123 = sbr.rel (%p121) target = $region20
      $region19: #{dil_conv_forward.3} parent=11 // pred_region
        _
      $region20: #{dil_conv_forward.3} parent=11 // pred_fallthru
        _
    $region12: #{dil_conv_forward.3} parent=5 // pred_fallthru
      _
    %p124 = scmp.lt.s32.totalorder %s9, 2
    // Predicated region
    $region21: #{dil_conv_forward.3} parent=5 // pred_check
      %p125 = pneg %p124
    $region22: #{dil_conv_forward.3} parent=5 // pred_check_branch
      %127 = sbr.rel (%p125) target = $region24
    $region23: #{dil_conv_forward.3} parent=5 // pred_region
      // Predicated region
      $region25: #{dil_conv_forward.3} parent=23 // pred_check
        %p128 = pneg %p29
      $region26: #{dil_conv_forward.3} parent=23 // pred_check_branch
        %130 = sbr.rel (%p128) target = $region28
      $region27: #{dil_conv_forward.3} parent=23 // pred_region
        %s131 = smul.u32 4, %s9
        %p132 = scmp.lt.s32.totalorder %s131, 7
        %s133 = scalar_select %p132, %s131, 7
        %s134 = smul.addr %s133, 8
        %s135 = scalar_lea.vmem %s0, %s134
        %s136 = smul.u32 4, %s9
      $region28: #{dil_conv_forward.3} parent=23 // pred_fallthru
        _
    $region24: #{dil_conv_forward.3} parent=5 // pred_fallthru
      _
    %p137 = scmp.le.s32.totalorder 1, %s9
    %p138 = scmp.lt.s32.totalorder %s9, 3
    %p139 = pnand %p137, %p138
    %p140 = pneg %p139
    // Predicated region
    $region29: #{dil_conv_forward.3} parent=5 // pred_check
      _
    $region30: #{dil_conv_forward.3} parent=5 // pred_check_branch
      %142 = sbr.rel (%p139) target = $region32
    $region31: #{dil_conv_forward.3} parent=5 // pred_region
      %s143 = ssub.s32 %s9, 1
      %s144 = smul.u32 4, %s14
      %p145 = scmp.lt.s32.totalorder %s144, 7
      %s146 = scalar_select %p145, %s144, 7
      %s147 = smul.addr %s146, 8
      %s148 = scalar_lea.vmem %s0, %s147
      %p149 = pneg %p35
      %p150 = pneg %p32
      %p151 = pneg %p56
      %p152 = pneg %p53
      %p153 = pneg %p77
      %p154 = pneg %p74
      %p155 = pneg %p103
      %p156 = pneg %p100
      %s157 = smul.u32 4, %s14
      %p158 = scmp.lt.s32.totalorder %s157, 7
      %s159 = scalar_select %p158, %s157, 7
      %s160 = smul.addr %s159, 8
      %s161 = scalar_lea.vmem %s3, %s160
      %s162 = smul.u32 4, %s14
      %p163 = scmp.lt.s32.totalorder %s162, 7
      %s164 = scalar_select %p163, %s162, 7
      %s165 = smul.addr %s164, 8
      %s166 = scalar_lea.vmem %s0, %s165
      %s167 = smul.u32 4, %s14
      %s168 = smul.u32 4, %s14
      %p169 = scmp.lt.s32.totalorder %s168, 7
      %s170 = scalar_select %p169, %s168, 7
      %s171 = smul.addr %s170, 8
      %s172 = scalar_lea.vmem %s3, %s171
      %s173 = smul.u32 4, %s14
      %v174 = vld [vmem:[%s166] sm:$0xff]
      %v175 = vld [vmem:[%s166 + $0x8] sm:$0xff]
      %v176 = vld [vmem:[%s166 + $0x10] sm:$0xff]
      %v177 = vld [vmem:[%s166 + $0x18] sm:$0xff]
      %v178 = vld [vmem:[%s1] sm:$0xff]
      %180 = vset.pattern.permute.xlu0 0
      %181 = vperm.xlu0 %180, %v178
      %v182 = vpop.permute.xlu0 %181
      %v184 = vmul.f32 %v174, %v182
      %v185 = vmul.f32 %v175, %v182
      %v186 = vmul.f32 %v176, %v182
      %v187 = vmul.f32 %v177, %v182
      %v188 = vld [vmem:[%s2] sm:$0xff]
      %190 = vset.pattern.permute.xlu0 0
      %191 = vperm.xlu0 %190, %v188
      %v192 = vpop.permute.xlu0 %191
      %v194 = vadd.f32 %v184, %v192
      %v195 = vadd.f32 %v185, %v192
      %v196 = vadd.f32 %v186, %v192
      %v197 = vadd.f32 %v187, %v192
      %198 = vst [vmem:[%s172] sm:$0xff] %v194
      %199 = vst [vmem:[%s172 + $0x8] sm:$0xff] %v195
      %200 = vst [vmem:[%s172 + $0x10] sm:$0xff] %v196
      %201 = vst [vmem:[%s172 + $0x18] sm:$0xff] %v197
      %s202 = smul.u32 4, %s14
      %p203 = scmp.lt.s32.totalorder %s202, 7
      %s204 = scalar_select %p203, %s202, 7
      %s205 = smul.addr %s204, 8
      %s206 = scalar_lea.vmem %s3, %s205
      // Predicated region
      $region33: #{dil_conv_forward.3} parent=31 // pred_check
        %p207 = pneg %p100
      $region34: #{dil_conv_forward.3} parent=31 // pred_check_branch
        %209 = sbr.rel (%p207) target = $region36
      $region35: #{dil_conv_forward.3} parent=31 // pred_region
        %s210 = smul.u32 4, %s14
      $region36: #{dil_conv_forward.3} parent=31 // pred_fallthru
        _
    $region32: #{dil_conv_forward.3} parent=5 // pred_fallthru
      _
    %p211 = scmp.le.s32.totalorder 2, %s9
    // Predicated region
    $region37: #{dil_conv_forward.3} parent=5 // pred_check
      %p212 = pneg %p211
    $region38: #{dil_conv_forward.3} parent=5 // pred_check_branch
      %214 = sbr.rel (%p212) target = $region40
    $region39: #{dil_conv_forward.3} parent=5 // pred_region
      %s215 = ssub.s32 %s9, 2
      // Predicated region
      $region41: #{dil_conv_forward.3} parent=39 // pred_check
        %p216 = pneg %p106
      $region42: #{dil_conv_forward.3} parent=39 // pred_check_branch
        %218 = sbr.rel (%p216) target = $region44
      $region43: #{dil_conv_forward.3} parent=39 // pred_region
        %s219 = smul.u32 4, %s15
        %p220 = scmp.lt.s32.totalorder %s219, 7
        %s221 = scalar_select %p220, %s219, 7
        %s222 = smul.addr %s221, 8
        %s223 = scalar_lea.vmem %s3, %s222
      $region44: #{dil_conv_forward.3} parent=39 // pred_fallthru
        _
    $region40: #{dil_conv_forward.3} parent=5 // pred_fallthru
      _
  $region6: #{dil_conv_forward.3} parent=0 // loop_footer
    %s13 = sadd.s32 1, %s9
  $region7: #{dil_conv_forward.3} parent=0 // loop_footer_branch
    %8 = sbr.rel target = $region3
  $region8: #{dil_conv_forward.3} parent=0 // loop_exit
    _

// kernel: dil_conv_forward.2
$region0: #{dil_conv_forward.2}
  #allocation0 [shape = 'u32[]', space=smem, size = 0x4, offset = 0x4, fixed_abs, tag = 'smem constant byte address 0x4 - core index']
  #allocation1 [shape = 'u32[72,128]{1,0:T(1,128)}', space=vmem, size = 0x9000, scoped, tag = 'internal scratch']
  %s0 = inlined_call_operand.vmem [shape: f32[8,1152], index: 0, kind: input, shape index: {}, may-alias: {0,1}]
  %s1 = inlined_call_operand.vmem [shape: f32[8,1152], index: 1, kind: input, shape index: {}, may-alias: {0,1}]
  %s2 = inlined_call_operand.vmem [shape: f32[8,72], index: 2, kind: input, shape index: {}]
  %s3 = inlined_call_operand.vmem [shape: f32[1,1152], index: 3, kind: input, shape index: {}]
  %s4 = inlined_call_operand.vmem [shape: f32[8,1024], index: 4, kind: output, shape index: {0}]
  %s5 = inlined_call_operand.vmem [shape: f32[2,8,2], index: 5, kind: output, shape index: {1}]
  %6 = xla_tuple %s4, %s5
  %s7 = sld [smem:[#allocation0]]
  $region57: #{dil_conv_forward.2} parent=0
    _
  %s9 = ssub.s32 1, %s7
  %s10 = scalar_select 0, %s9, %s7
  loop: start=0, step=1, limit=4
  $region2: #{dil_conv_forward.2} parent=0 // loop_pre_header
    _
  $region3: #{dil_conv_forward.2} parent=0 // loop_header
    %s12 = sphi 0, %s16
    %p13 = scmp.ge.s32.totalorder %s12, 4
    %s22 = sphi 0, %s24
    %s25 = sphi 0, %s22
    %s26 = sphi 0, %s25
    %s42 = sphi 0, %s26
    %s52 = sphi 0, %s54
    %s55 = sphi 0, %s52
    %s56 = sphi 0, %s55
    %s72 = sphi 0, %s56
    %s76 = sphi 0, %s76
    %s78 = sphi 0, %s76
    %s79 = sphi 0, %s78
    %s93 = sphi 0, %s79
    %s97 = sphi 0, %s97
    %s99 = sphi 0, %s97
    %s100 = sphi 0, %s99
    %s114 = sphi 0, %s100
    %s120 = sphi 0, %s122
    %s123 = sphi 0, %s120
    %s124 = sphi 0, %s123
    %s140 = sphi 0, %s124
    %s146 = sphi 0, %s148
    %s149 = sphi 0, %s146
    %s150 = sphi 0, %s149
    %s166 = sphi 0, %s150
  $region4: #{dil_conv_forward.2} parent=0 // loop_header_branch
    %15 = sbr.rel (%p13) target = $region8
  $region5: #{dil_conv_forward.2} parent=0 // loop_body
    %s17 = ssub.s32 %s12, 1
    %s18 = ssub.s32 %s12, 2
    %s19 = sadd.s32 %s12, 1
    %s20 = ssub.s32 %s12, %s19
    %p21 = scmp.eq.s32.totalorder %s20, 0
    %s23 = sadd.s32 %s22, 1
    %s24 = scalar_select %p21, %s22, %s23
    %p27 = pneg %p21
    %p28 = scmp.eq.s32.totalorder %s12, 1
    %p29 = por %p27, %p28
    %p30 = scmp.ne.s32.totalorder %s22, %s25
    %p31 = scmp.eq.s32.totalorder %s12, 0
    %p32 = por %p30, %p31
    %p33 = scmp.ne.s32.totalorder %s22, %s25
    %p34 = scmp.eq.s32.totalorder %s17, 1
    %p35 = por %p33, %p34
    %p36 = scmp.ne.s32.totalorder %s25, %s26
    %p37 = scmp.eq.s32.totalorder %s17, 0
    %p38 = por %p36, %p37
    %p39 = scmp.ne.s32.totalorder %s25, %s26
    %p40 = scmp.eq.s32.totalorder %s18, 1
    %p41 = por %p39, %p40
    %p43 = scmp.ne.s32.totalorder %s26, %s42
    %p44 = scmp.eq.s32.totalorder %s18, 0
    %p45 = por %p43, %p44
    %s46 = sadd.s32 %s12, 1
    %s47 = smul.u32 %s46, 4
    %s48 = sadd.s32 %s19, 1
    %s49 = smul.u32 %s48, 4
    %s50 = ssub.s32 %s47, %s49
    %p51 = scmp.eq.s32.totalorder %s50, 0
    %s53 = sadd.s32 %s52, 1
    %s54 = scalar_select %p51, %s52, %s53
    %p57 = pneg %p51
    %p58 = scmp.eq.s32.totalorder %s12, 1
    %p59 = por %p57, %p58
    %p60 = scmp.ne.s32.totalorder %s52, %s55
    %p61 = scmp.eq.s32.totalorder %s12, 0
    %p62 = por %p60, %p61
    %p63 = scmp.ne.s32.totalorder %s52, %s55
    %p64 = scmp.eq.s32.totalorder %s17, 1
    %p65 = por %p63, %p64
    %p66 = scmp.ne.s32.totalorder %s55, %s56
    %p67 = scmp.eq.s32.totalorder %s17, 0
    %p68 = por %p66, %p67
    %p69 = scmp.ne.s32.totalorder %s55, %s56
    %p70 = scmp.eq.s32.totalorder %s18, 1
    %p71 = por %p69, %p70
    %p73 = scmp.ne.s32.totalorder %s56, %s72
    %p74 = scmp.eq.s32.totalorder %s18, 0
    %p75 = por %p73, %p74
    %s77 = sadd.s32 %s76, 1
    %p80 = scmp.eq.s32.totalorder %s12, 1
    %p81 = scmp.ne.s32.totalorder %s76, %s78
    %p82 = scmp.eq.s32.totalorder %s12, 0
    %p83 = por %p81, %p82
    %p84 = scmp.ne.s32.totalorder %s76, %s78
    %p85 = scmp.eq.s32.totalorder %s17, 1
    %p86 = por %p84, %p85
    %p87 = scmp.ne.s32.totalorder %s78, %s79
    %p88 = scmp.eq.s32.totalorder %s17, 0
    %p89 = por %p87, %p88
    %p90 = scmp.ne.s32.totalorder %s78, %s79
    %p91 = scmp.eq.s32.totalorder %s18, 1
    %p92 = por %p90, %p91
    %p94 = scmp.ne.s32.totalorder %s79, %s93
    %p95 = scmp.eq.s32.totalorder %s18, 0
    %p96 = por %p94, %p95
    %s98 = sadd.s32 %s97, 1
    %p101 = scmp.eq.s32.totalorder %s12, 1
    %p102 = scmp.ne.s32.totalorder %s97, %s99
    %p103 = scmp.eq.s32.totalorder %s12, 0
    %p104 = por %p102, %p103
    %p105 = scmp.ne.s32.totalorder %s97, %s99
    %p106 = scmp.eq.s32.totalorder %s17, 1
    %p107 = por %p105, %p106
    %p108 = scmp.ne.s32.totalorder %s99, %s100
    %p109 = scmp.eq.s32.totalorder %s17, 0
    %p110 = por %p108, %p109
    %p111 = scmp.ne.s32.totalorder %s99, %s100
    %p112 = scmp.eq.s32.totalorder %s18, 1
    %p113 = por %p111, %p112
    %p115 = scmp.ne.s32.totalorder %s100, %s114
    %p116 = scmp.eq.s32.totalorder %s18, 0
    %p117 = por %p115, %p116
    %s118 = ssub.s32 %s12, %s19
    %p119 = scmp.eq.s32.totalorder %s118, 0
    %s121 = sadd.s32 %s120, 1
    %s122 = scalar_select %p119, %s120, %s121
    %p125 = pneg %p119
    %p126 = scmp.eq.s32.totalorder %s12, 1
    %p127 = por %p125, %p126
    %p128 = scmp.ne.s32.totalorder %s120, %s123
    %p129 = scmp.eq.s32.totalorder %s12, 0
    %p130 = por %p128, %p129
    %p131 = scmp.ne.s32.totalorder %s120, %s123
    %p132 = scmp.eq.s32.totalorder %s17, 1
    %p133 = por %p131, %p132
    %p134 = scmp.ne.s32.totalorder %s123, %s124
    %p135 = scmp.eq.s32.totalorder %s17, 0
    %p136 = por %p134, %p135
    %p137 = scmp.ne.s32.totalorder %s123, %s124
    %p138 = scmp.eq.s32.totalorder %s18, 1
    %p139 = por %p137, %p138
    %p141 = scmp.ne.s32.totalorder %s124, %s140
    %p142 = scmp.eq.s32.totalorder %s18, 0
    %p143 = por %p141, %p142
    %s144 = ssub.s32 %s12, %s19
    %p145 = scmp.eq.s32.totalorder %s144, 0
    %s147 = sadd.s32 %s146, 1
    %s148 = scalar_select %p145, %s146, %s147
    %p151 = pneg %p145
    %p152 = scmp.eq.s32.totalorder %s12, 1
    %p153 = por %p151, %p152
    %p154 = scmp.ne.s32.totalorder %s146, %s149
    %p155 = scmp.eq.s32.totalorder %s12, 0
    %p156 = por %p154, %p155
    %p157 = scmp.ne.s32.totalorder %s146, %s149
    %p158 = scmp.eq.s32.totalorder %s17, 1
    %p159 = por %p157, %p158
    %p160 = scmp.ne.s32.totalorder %s149, %s150
    %p161 = scmp.eq.s32.totalorder %s17, 0
    %p162 = por %p160, %p161
    %p163 = scmp.ne.s32.totalorder %s149, %s150
    %p164 = scmp.eq.s32.totalorder %s18, 1
    %p165 = por %p163, %p164
    %p167 = scmp.ne.s32.totalorder %s150, %s166
    %p168 = scmp.eq.s32.totalorder %s18, 0
    %p169 = por %p167, %p168
    %p170 = scmp.le.s32.totalorder 1, %s12
    %p171 = scmp.lt.s32.totalorder %s12, 3
    %p172 = pnand %p170, %p171
    %p173 = pneg %p172
    // Predicated region
    $region9: #{dil_conv_forward.2} parent=5 // pred_check
      _
    $region10: #{dil_conv_forward.2} parent=5 // pred_check_branch
      %175 = sbr.rel (%p172) target = $region12
    $region11: #{dil_conv_forward.2} parent=5 // pred_region
      %s176 = ssub.s32 %s12, 1
      // Predicated region
      $region13: #{dil_conv_forward.2} parent=11 // pred_check
        %p177 = pneg %p89
      $region14: #{dil_conv_forward.2} parent=11 // pred_check_branch
        %179 = sbr.rel (%p177) target = $region16
      $region15: #{dil_conv_forward.2} parent=11 // pred_region
        _
      $region16: #{dil_conv_forward.2} parent=11 // pred_fallthru
        _
      // Predicated region
      $region17: #{dil_conv_forward.2} parent=11 // pred_check
        %p180 = pneg %p110
      $region18: #{dil_conv_forward.2} parent=11 // pred_check_branch
        %182 = sbr.rel (%p180) target = $region20
      $region19: #{dil_conv_forward.2} parent=11 // pred_region
        _
      $region20: #{dil_conv_forward.2} parent=11 // pred_fallthru
        _
    $region12: #{dil_conv_forward.2} parent=5 // pred_fallthru
      _
    %p183 = scmp.lt.s32.totalorder %s12, 2
    // Predicated region
    $region21: #{dil_conv_forward.2} parent=5 // pred_check
      %p184 = pneg %p183
    $region22: #{dil_conv_forward.2} parent=5 // pred_check_branch
      %186 = sbr.rel (%p184) target = $region24
    $region23: #{dil_conv_forward.2} parent=5 // pred_region
      // Predicated region
      $region25: #{dil_conv_forward.2} parent=23 // pred_check
        %p187 = pneg %p32
      $region26: #{dil_conv_forward.2} parent=23 // pred_check_branch
        %189 = sbr.rel (%p187) target = $region28
      $region27: #{dil_conv_forward.2} parent=23 // pred_region
        %s190 = smul.u32 4, %s12
        %s191 = ssub.s32 9, %s190
        %p192 = scmp.lt.s32.totalorder %s191, 4
        %s193 = scalar_select %p192, %s191, 4
        %s194 = smul.u32 8, %s193
        %p195 = scmp.lt.s32.totalorder %s190, 8
        %s196 = scalar_select %p195, %s190, 8
        %s197 = smul.addr %s196, 8
        %s198 = scalar_lea.vmem %s0, %s197
        %s199 = smul.u32 4, %s12
        %s200 = ssub.s32 9, %s199
        %p201 = scmp.lt.s32.totalorder %s200, 4
        %s202 = scalar_select %p201, %s200, 4
        %s203 = smul.u32 8, %s202
      $region28: #{dil_conv_forward.2} parent=23 // pred_fallthru
        _
      // Predicated region
      $region29: #{dil_conv_forward.2} parent=23 // pred_check
        %p204 = pneg %p62
      $region30: #{dil_conv_forward.2} parent=23 // pred_check_branch
        %206 = sbr.rel (%p204) target = $region32
      $region31: #{dil_conv_forward.2} parent=23 // pred_region
        %s207 = sadd.s32 %s12, 1
        %s208 = smul.u32 %s207, 4
        %p209 = scmp.lt.s32.totalorder %s208, 8
        %s210 = scalar_select %p209, %s208, 8
        %s211 = smul.addr %s210, 8
        %s212 = scalar_lea.vmem %s1, %s211
        %s213 = sadd.s32 %s12, 1
        %s214 = smul.u32 %s213, 4
      $region32: #{dil_conv_forward.2} parent=23 // pred_fallthru
        _
    $region24: #{dil_conv_forward.2} parent=5 // pred_fallthru
      _
    %p215 = scmp.le.s32.totalorder 1, %s12
    %p216 = scmp.lt.s32.totalorder %s12, 3
    %p217 = pnand %p215, %p216
    %p218 = pneg %p217
    // Predicated region
    $region33: #{dil_conv_forward.2} parent=5 // pred_check
      _
    $region34: #{dil_conv_forward.2} parent=5 // pred_check_branch
      %220 = sbr.rel (%p217) target = $region36
    $region35: #{dil_conv_forward.2} parent=5 // pred_region
      %s221 = ssub.s32 %s12, 1
      %s222 = smul.u32 4, %s17
      %s223 = ssub.s32 9, %s222
      %p224 = scmp.lt.s32.totalorder %s223, 4
      %s225 = scalar_select %p224, %s223, 4
      %s226 = smul.u32 8, %s225
      %p227 = scmp.lt.s32.totalorder %s222, 8
      %s228 = scalar_select %p227, %s222, 8
      %s229 = smul.addr %s228, 8
      %s230 = scalar_lea.vmem %s0, %s229
      %p231 = pneg %p38
      %p232 = pneg %p35
      %s233 = sadd.s32 %s17, 1
      %s234 = smul.u32 %s233, 4
      %p235 = scmp.lt.s32.totalorder %s234, 8
      %s236 = scalar_select %p235, %s234, 8
      %s237 = smul.addr %s236, 8
      %s238 = scalar_lea.vmem %s1, %s237
      %p239 = pneg %p68
      %p240 = pneg %p65
      %p241 = pneg %p89
      %p242 = pneg %p86
      %p243 = pneg %p110
      %p244 = pneg %p107
      %p245 = pneg %p136
      %p246 = pneg %p133
      %s247 = smul.u32 4, %s17
      %p248 = scmp.lt.s32.totalorder %s247, 7
      %s249 = scalar_select %p248, %s247, 7
      %s250 = smul.addr %s249, 8
      %s251 = scalar_lea.vmem %s4, %s250
      %p252 = pneg %p162
      %p253 = pneg %p159
      %p254 = scmp.lt.s32.totalorder %s17, 1
      %s255 = scalar_select %p254, %s17, 1
      %s256 = smul.addr %s255, 8
      %s257 = scalar_lea.vmem %s5, %s256
      %s258 = smul.u32 4, %s17
      %s259 = ssub.s32 9, %s258
      %p260 = scmp.lt.s32.totalorder %s259, 4
      %s261 = scalar_select %p260, %s259, 4
      %s262 = smul.u32 8, %s261
      %p263 = scmp.lt.s32.totalorder %s258, 8
      %s264 = scalar_select %p263, %s258, 8
      %s265 = smul.addr %s264, 8
      %s266 = scalar_lea.vmem %s0, %s265
      %s267 = smul.u32 4, %s17
      %s268 = ssub.s32 9, %s267
      %p269 = scmp.lt.s32.totalorder %s268, 4
      %s270 = scalar_select %p269, %s268, 4
      %s271 = smul.u32 8, %s270
      %s272 = sadd.s32 %s17, 1
      %s273 = smul.u32 %s272, 4
      %p274 = scmp.lt.s32.totalorder %s273, 8
      %s275 = scalar_select %p274, %s273, 8
      %s276 = smul.addr %s275, 8
      %s277 = scalar_lea.vmem %s1, %s276
      %s278 = sadd.s32 %s17, 1
      %s279 = smul.u32 %s278, 4
      %s280 = smul.u32 4, %s17
      %p281 = scmp.lt.s32.totalorder %s280, 7
      %s282 = scalar_select %p281, %s280, 7
      %s283 = smul.addr %s282, 8
      %s284 = scalar_lea.vmem %s4, %s283
      %s285 = smul.u32 4, %s17
      %p286 = scmp.lt.s32.totalorder %s17, 1
      %s287 = scalar_select %p286, %s17, 1
      %s288 = smul.addr %s287, 8
      %s289 = scalar_lea.vmem %s5, %s288
      %v290 = vld [vmem:[%s266] sm:$0xff]
      %v291 = vld [vmem:[%s266 + $0x8] sm:$0xff]
      %v292 = vld [vmem:[%s266 + $0x10] sm:$0xff]
      %v293 = vld [vmem:[%s266 + $0x18] sm:$0xff]
      %v294 = vld [vmem:[%s277] sm:$0xff]
      %v295 = vmax.f32 %v290, 0.0
      %v296 = vmax.f32 %v291, 0.0
      %v297 = vmax.f32 %v292, 0.0
      %v298 = vmax.f32 %v293, 0.0
      %v299 = vmax.f32 %v294, 0.0
      %305 = vrot.lane.b32.xlu0 %v295, 126
      %v306 = vpop.permute.xlu0 %305
      %307 = vrot.lane.b32.xlu0 %v296, 126
      %v308 = vpop.permute.xlu0 %307
      %309 = vrot.lane.b32.xlu0 %v297, 126
      %v310 = vpop.permute.xlu0 %309
      %311 = vrot.lane.b32.xlu0 %v298, 126
      %v312 = vpop.permute.xlu0 %311
      %313 = vrot.lane.b32.xlu0 %v299, 126
      %v314 = vpop.permute.xlu0 %313
      %vm315 = vcmask 1031168
      %v316 = vsel %vm315, %v306, %v308
      %v317 = vsel %vm315, %v308, %v310
      %v318 = vsel %vm315, %v310, %v312
      %v319 = vsel %vm315, %v312, %v314
      %324 = vrot.lane.b32.xlu0 %v295, 124
      %v325 = vpop.permute.xlu0 %324
      %326 = vrot.lane.b32.xlu0 %v296, 124
      %v327 = vpop.permute.xlu0 %326
      %328 = vrot.lane.b32.xlu0 %v297, 124
      %v329 = vpop.permute.xlu0 %328
      %330 = vrot.lane.b32.xlu0 %v298, 124
      %v331 = vpop.permute.xlu0 %330
      %332 = vrot.lane.b32.xlu0 %v299, 124
      %v333 = vpop.permute.xlu0 %332
      %vm334 = vcmask 1014784
      %v335 = vsel %vm334, %v325, %v327
      %v336 = vsel %vm334, %v327, %v329
      %v337 = vsel %vm334, %v329, %v331
      %v338 = vsel %vm334, %v331, %v333
      %343 = vrot.lane.b32.xlu0 %v295, 88
      %v344 = vpop.permute.xlu0 %343
      %345 = vrot.lane.b32.xlu0 %v296, 88
      %v346 = vpop.permute.xlu0 %345
      %347 = vrot.lane.b32.xlu0 %v297, 88
      %v348 = vpop.permute.xlu0 %347
      %349 = vrot.lane.b32.xlu0 %v298, 88
      %v350 = vpop.permute.xlu0 %349
      %351 = vrot.lane.b32.xlu0 %v299, 88
      %v352 = vpop.permute.xlu0 %351
      %vm353 = vcmask 719872
      %v354 = vsel %vm353, %v344, %v346
      %v355 = vsel %vm353, %v346, %v348
      %v356 = vsel %vm353, %v348, %v350
      %v357 = vsel %vm353, %v350, %v352
      %362 = vrot.lane.b32.xlu0 %v295, 86
      %v363 = vpop.permute.xlu0 %362
      %364 = vrot.lane.b32.xlu0 %v296, 86
      %v365 = vpop.permute.xlu0 %364
      %366 = vrot.lane.b32.xlu0 %v297, 86
      %v367 = vpop.permute.xlu0 %366
      %368 = vrot.lane.b32.xlu0 %v298, 86
      %v369 = vpop.permute.xlu0 %368
      %370 = vrot.lane.b32.xlu0 %v299, 86
      %v371 = vpop.permute.xlu0 %370
      %vm372 = vcmask 703488
      %v373 = vsel %vm372, %v363, %v365
      %v374 = vsel %vm372, %v365, %v367
      %v375 = vsel %vm372, %v367, %v369
      %v376 = vsel %vm372, %v369, %v371
      %381 = vrot.lane.b32.xlu0 %v295, 84
      %v382 = vpop.permute.xlu0 %381
      %383 = vrot.lane.b32.xlu0 %v296, 84
      %v384 = vpop.permute.xlu0 %383
      %385 = vrot.lane.b32.xlu0 %v297, 84
      %v386 = vpop.permute.xlu0 %385
      %387 = vrot.lane.b32.xlu0 %v298, 84
      %v388 = vpop.permute.xlu0 %387
      %389 = vrot.lane.b32.xlu0 %v299, 84
      %v390 = vpop.permute.xlu0 %389
      %vm391 = vcmask 687104
      %v392 = vsel %vm391, %v382, %v384
      %v393 = vsel %vm391, %v384, %v386
      %v394 = vsel %vm391, %v386, %v388
      %v395 = vsel %vm391, %v388, %v390
      %400 = vrot.lane.b32.xlu0 %v295, 48
      %v401 = vpop.permute.xlu0 %400
      %402 = vrot.lane.b32.xlu0 %v296, 48
      %v403 = vpop.permute.xlu0 %402
      %404 = vrot.lane.b32.xlu0 %v297, 48
      %v405 = vpop.permute.xlu0 %404
      %406 = vrot.lane.b32.xlu0 %v298, 48
      %v407 = vpop.permute.xlu0 %406
      %408 = vrot.lane.b32.xlu0 %v299, 48
      %v409 = vpop.permute.xlu0 %408
      %vm410 = vcmask 392192
      %v411 = vsel %vm410, %v401, %v403
      %v412 = vsel %vm410, %v403, %v405
      %v413 = vsel %vm410, %v405, %v407
      %v414 = vsel %vm410, %v407, %v409
      %419 = vrot.lane.b32.xlu0 %v295, 46
      %v420 = vpop.permute.xlu0 %419
      %421 = vrot.lane.b32.xlu0 %v296, 46
      %v422 = vpop.permute.xlu0 %421
      %423 = vrot.lane.b32.xlu0 %v297, 46
      %v424 = vpop.permute.xlu0 %423
      %425 = vrot.lane.b32.xlu0 %v298, 46
      %v426 = vpop.permute.xlu0 %425
      %427 = vrot.lane.b32.xlu0 %v299, 46
      %v428 = vpop.permute.xlu0 %427
      %vm429 = vcmask 375808
      %v430 = vsel %vm429, %v420, %v422
      %v431 = vsel %vm429, %v422, %v424
      %v432 = vsel %vm429, %v424, %v426
      %v433 = vsel %vm429, %v426, %v428
      %438 = vrot.lane.b32.xlu0 %v295, 44
      %v439 = vpop.permute.xlu0 %438
      %440 = vrot.lane.b32.xlu0 %v296, 44
      %v441 = vpop.permute.xlu0 %440
      %442 = vrot.lane.b32.xlu0 %v297, 44
      %v443 = vpop.permute.xlu0 %442
      %444 = vrot.lane.b32.xlu0 %v298, 44
      %v445 = vpop.permute.xlu0 %444
      %446 = vrot.lane.b32.xlu0 %v299, 44
      %v447 = vpop.permute.xlu0 %446
      %vm448 = vcmask 359424
      %v449 = vsel %vm448, %v439, %v441
      %v450 = vsel %vm448, %v441, %v443
      %v451 = vsel %vm448, %v443, %v445
      %v452 = vsel %vm448, %v445, %v447
      %v457 = vld [vmem:[%s2] sm:$0xff]
      %vm458 = vcmask 588800
      %v460 = vsel %vm458, %v457, 0
      %462 = vmatpush.msra.mxu0 0.0
      %463 = vmatpush.msra.mxu0 0.0
      %464 = vmatpush.msra.mxu0 0.0
      %465 = vmatpush.msra.mxu0 0.0
      %466 = vmatpush.msra.mxu0 0.0
      %467 = vmatpush.msra.mxu0 0.0
      %468 = vmatpush.msra.mxu0 0.0
      %469 = vmatpush.msra.mxu0 %v449
      %470 = vmatpush.msra.mxu0 %v430
      %471 = vmatpush.msra.mxu0 %v411
      %472 = vmatpush.msra.mxu0 %v392
      %473 = vmatpush.msra.mxu0 %v373
      %474 = vmatpush.msra.mxu0 %v354
      %475 = vmatpush.msra.mxu0 %v335
      %476 = vmatpush.msra.mxu0 %v316
      %477 = vmatpush.msra.mxu0 %v295
      %478 = vmatmul.f32.gmra.mxu0 %v460
      %v479 = vpop.f32.mrf.mxu0
      %v480 = vadd.f32 0.0, %v479
      %481 = vdwg.mxu0
      %482 = vmatpush.msra.mxu0 0.0
      %483 = vmatpush.msra.mxu0 0.0
      %484 = vmatpush.msra.mxu0 0.0
      %485 = vmatpush.msra.mxu0 0.0
      %486 = vmatpush.msra.mxu0 0.0
      %487 = vmatpush.msra.mxu0 0.0
      %488 = vmatpush.msra.mxu0 0.0
      %489 = vmatpush.msra.mxu0 %v450
      %490 = vmatpush.msra.mxu0 %v431
      %491 = vmatpush.msra.mxu0 %v412
      %492 = vmatpush.msra.mxu0 %v393
      %493 = vmatpush.msra.mxu0 %v374
      %494 = vmatpush.msra.mxu0 %v355
      %495 = vmatpush.msra.mxu0 %v336
      %496 = vmatpush.msra.mxu0 %v317
      %497 = vmatpush.msra.mxu0 %v296
      %498 = vmatmul.f32.gmra.mxu0 %v460
      %v499 = vpop.f32.mrf.mxu0
      %v500 = vadd.f32 0.0, %v499
      %501 = vdwg.mxu0
      %502 = vmatpush.msra.mxu0 0.0
      %503 = vmatpush.msra.mxu0 0.0
      %504 = vmatpush.msra.mxu0 0.0
      %505 = vmatpush.msra.mxu0 0.0
      %506 = vmatpush.msra.mxu0 0.0
      %507 = vmatpush.msra.mxu0 0.0
      %508 = vmatpush.msra.mxu0 0.0
      %509 = vmatpush.msra.mxu0 %v451
      %510 = vmatpush.msra.mxu0 %v432
      %511 = vmatpush.msra.mxu0 %v413
      %512 = vmatpush.msra.mxu0 %v394
      %513 = vmatpush.msra.mxu0 %v375
      %514 = vmatpush.msra.mxu0 %v356
      %515 = vmatpush.msra.mxu0 %v337
      %516 = vmatpush.msra.mxu0 %v318
      %517 = vmatpush.msra.mxu0 %v297
      %518 = vmatmul.f32.gmra.mxu0 %v460
      %v519 = vpop.f32.mrf.mxu0
      %v520 = vadd.f32 0.0, %v519
      %521 = vdwg.mxu0
      %522 = vmatpush.msra.mxu0 0.0
      %523 = vmatpush.msra.mxu0 0.0
      %524 = vmatpush.msra.mxu0 0.0
      %525 = vmatpush.msra.mxu0 0.0
      %526 = vmatpush.msra.mxu0 0.0
      %527 = vmatpush.msra.mxu0 0.0
      %528 = vmatpush.msra.mxu0 0.0
      %529 = vmatpush.msra.mxu0 %v452
      %530 = vmatpush.msra.mxu0 %v433
      %531 = vmatpush.msra.mxu0 %v414
      %532 = vmatpush.msra.mxu0 %v395
      %533 = vmatpush.msra.mxu0 %v376
      %534 = vmatpush.msra.mxu0 %v357
      %535 = vmatpush.msra.mxu0 %v338
      %536 = vmatpush.msra.mxu0 %v319
      %537 = vmatpush.msra.mxu0 %v298
      %538 = vmatmul.f32.gmra.mxu0 %v460
      %v539 = vpop.f32.mrf.mxu0
      %v540 = vadd.f32 0.0, %v539
      %541 = vdwg.mxu0
      %542 = vst [vmem:[%s284] sm:$0xff] %v480
      %543 = vst [vmem:[%s284 + $0x8] sm:$0xff] %v500
      %544 = vst [vmem:[%s284 + $0x10] sm:$0xff] %v520
      %545 = vst [vmem:[%s284 + $0x18] sm:$0xff] %v540
      %s546 = smul.u32 %s17, 512
      %s547 = sshra.s32 %s546, 7
      %s548 = sand.u32 %s546, 127
      %s549 = scalar_lea.vmem %s3, %s547
      %v550 = vld [vmem:[%s549] sm:$0xf]
      %v552 = vperm.slane %v550, 0
      %v553 = vperm.slane %v550, 1
      %v554 = vperm.slane %v550, 2
      %v555 = vperm.slane %v550, 3
      %v560 = vmul.f32 %v480, %v552
      %v561 = vmul.f32 %v500, %v553
      %v562 = vmul.f32 %v520, %v554
      %v563 = vmul.f32 %v540, %v555
      %v564 = vadd.f32 %v560, %v561
      %v565 = vadd.f32 %v564, %v562
      %v566 = vadd.f32 %v565, %v563
      %567 = vadd.xlane.f32.xlu0 %v566
      %v568 = vpop.xlane.xlu0 %567
      %vm569 = vcmask 7168
      %570 = vst.msk [vmem:[%s289] sm:$0xff] %vm569, %v568
      %v571 = vmul.f32 %v560, %v480
      %v572 = vmul.f32 %v561, %v500
      %v573 = vmul.f32 %v562, %v520
      %v574 = vmul.f32 %v563, %v540
      %v575 = vadd.f32 %v571, %v572
      %v576 = vadd.f32 %v575, %v573
      %v577 = vadd.f32 %v576, %v574
      %578 = vadd.xlane.f32.xlu0 %v577
      %v579 = vpop.xlane.xlu0 %578
      %vm580 = vcmask 15368
      %581 = vst.msk [vmem:[%s289] sm:$0xff] %vm580, %v579
      %s582 = smul.u32 4, %s17
      %p583 = scmp.lt.s32.totalorder %s582, 7
      %s584 = scalar_select %p583, %s582, 7
      %s585 = smul.addr %s584, 8
      %s586 = scalar_lea.vmem %s4, %s585
      %p587 = scmp.lt.s32.totalorder %s17, 1
      %s588 = scalar_select %p587, %s17, 1
      %s589 = smul.addr %s588, 8
      %s590 = scalar_lea.vmem %s5, %s589
      // Predicated region
      $region37: #{dil_conv_forward.2} parent=35 // pred_check
        %p591 = pneg %p133
      $region38: #{dil_conv_forward.2} parent=35 // pred_check_branch
        %593 = sbr.rel (%p591) target = $region40
      $region39: #{dil_conv_forward.2} parent=35 // pred_region
        %s594 = smul.u32 4, %s17
      $region40: #{dil_conv_forward.2} parent=35 // pred_fallthru
        _
      // Predicated region
      $region41: #{dil_conv_forward.2} parent=35 // pred_check
        %p595 = pneg %p159
      $region42: #{dil_conv_forward.2} parent=35 // pred_check_branch
        %597 = sbr.rel (%p595) target = $region44
      $region43: #{dil_conv_forward.2} parent=35 // pred_region
        _
      $region44: #{dil_conv_forward.2} parent=35 // pred_fallthru
        _
    $region36: #{dil_conv_forward.2} parent=5 // pred_fallthru
      _
    %p598 = scmp.le.s32.totalorder 2, %s12
    // Predicated region
    $region45: #{dil_conv_forward.2} parent=5 // pred_check
      %p599 = pneg %p598
    $region46: #{dil_conv_forward.2} parent=5 // pred_check_branch
      %601 = sbr.rel (%p599) target = $region48
    $region47: #{dil_conv_forward.2} parent=5 // pred_region
      %s602 = ssub.s32 %s12, 2
      // Predicated region
      $region49: #{dil_conv_forward.2} parent=47 // pred_check
        %p603 = pneg %p139
      $region50: #{dil_conv_forward.2} parent=47 // pred_check_branch
        %605 = sbr.rel (%p603) target = $region52
      $region51: #{dil_conv_forward.2} parent=47 // pred_region
        %s606 = smul.u32 4, %s18
        %p607 = scmp.lt.s32.totalorder %s606, 7
        %s608 = scalar_select %p607, %s606, 7
        %s609 = smul.addr %s608, 8
        %s610 = scalar_lea.vmem %s4, %s609
      $region52: #{dil_conv_forward.2} parent=47 // pred_fallthru
        _
      // Predicated region
      $region53: #{dil_conv_forward.2} parent=47 // pred_check
        %p611 = pneg %p165
      $region54: #{dil_conv_forward.2} parent=47 // pred_check_branch
        %613 = sbr.rel (%p611) target = $region56
      $region55: #{dil_conv_forward.2} parent=47 // pred_region
        %p614 = scmp.lt.s32.totalorder %s18, 1
        %s615 = scalar_select %p614, %s18, 1
        %s616 = smul.addr %s615, 8
        %s617 = scalar_lea.vmem %s5, %s616
      $region56: #{dil_conv_forward.2} parent=47 // pred_fallthru
        _
    $region48: #{dil_conv_forward.2} parent=5 // pred_fallthru
      _
  $region6: #{dil_conv_forward.2} parent=0 // loop_footer
    %s16 = sadd.s32 1, %s12
  $region7: #{dil_conv_forward.2} parent=0 // loop_footer_branch
    %11 = sbr.rel target = $region3
  $region8: #{dil_conv_forward.2} parent=0 // loop_exit
    _

</llo_original>
